<compile_context>
chip_gen: v7x
topology: tpu7x:2x2x1
jax: 0.10.0
libtpu: 0.0.40
codegen_flags: <defaults>
</compile_context>

<pallas_src>
import jax
import jax.numpy as jnp
from jax.experimental import pallas as pl
from jax.experimental.pallas import tpu as pltpu


def _round_up(x, m):
    return ((x + m - 1) // m) * m


def _tpu_defaults():
    """Generation-aware (tm, tn, tk, vmem_capacity_bytes)."""
    vmem_cap = 64 << 20  # conservative fallback (v7x per-TC VMEM)
    try:
        vmem_cap = int(pltpu.get_tpu_info().vmem_capacity_bytes)
    except Exception:
        pass
    vmem_cap = max(vmem_cap, 64 << 20)
    kind = ""
    try:
        kind = jax.devices()[0].device_kind.lower()
    except Exception:
        pass
    if vmem_cap <= (64 << 20) or "v7" in kind:
        # v7x: 64 MiB/TC, 3.2 TB/s HBM -> ~311 FLOP/byte threshold; 512 tiles
        # already reach it and leave headroom for 2 TCs.
        return 512, 512, 1024, vmem_cap
    if "v5" in kind:
        # v5e: ~240 FLOP/byte threshold; bigger tiles are wasted VMEM.
        return 512, 512, 1024, vmem_cap
    # v6e: 1.4 TB/s HBM needs ~656 FLOP/byte -> go big (~24 MiB footprint).
    return 1024, 1024, 2048, vmem_cap


def _conv1d_kernel_f32_out(x_ref, w_ref, b_ref, o_ref):
    """f32 output: accumulate directly into the k-invariant output block."""
    k = pl.program_id(2)

    @pl.when(k == 0)
    def _():
        o_ref[...] = jnp.zeros_like(o_ref)

    o_ref[...] += jnp.dot(x_ref[...], w_ref[...], preferred_element_type=jnp.float32)

    @pl.when(k == pl.num_programs(2) - 1)
    def _():
        o_ref[...] += b_ref[...]  # bias (f32) added exactly once


def _conv1d_kernel_acc(x_ref, w_ref, b_ref, o_ref, acc_ref):
    """Non-f32 output: f32 VMEM accumulator, cast on the final K step."""
    k = pl.program_id(2)

    @pl.when(k == 0)
    def _():
        acc_ref[...] = jnp.zeros_like(acc_ref)

    acc_ref[...] += jnp.dot(x_ref[...], w_ref[...], preferred_element_type=jnp.float32)

    @pl.when(k == pl.num_programs(2) - 1)
    def _():
        o_ref[...] = (acc_ref[...] + b_ref[...]).astype(o_ref.dtype)


def conv1d(x, weight, bias=None, *, tm=None, tn=None, tk=None, cast_to_bf16=True):
    """y = x @ weight + bias over the last axis of x.

    x:      (..., n_in)
    weight: (n_in, n_out)
    bias:   (n_out,) or None
    returns (..., n_out) in x's dtype.

    cast_to_bf16: when x is f32, feed the MXU bf16 copies of x/W (f32
    accumulation and f32 bias add are kept). Set False for bit-faithful f32.
    """
    n_in, n_out = weight.shape
    orig_shape = x.shape
    assert orig_shape[-1] == n_in
    x2 = x.reshape(-1, n_in)
    M = x2.shape[0]

    out_dtype = x.dtype
    mxu_dtype = out_dtype
    if cast_to_bf16 and out_dtype == jnp.float32:
        mxu_dtype = jnp.bfloat16

    d_tm, d_tn, d_tk, vmem_cap = _tpu_defaults()
    tm = d_tm if tm is None else tm
    tn = d_tn if tn is None else tn
    tk = d_tk if tk is None else tk

    in_isz = jnp.dtype(mxu_dtype).itemsize
    out_isz = jnp.dtype(out_dtype).itemsize
    # Minimum sublane multiple for the second-to-last block dim (dtype aware).
    sub = {4: 8, 2: 16, 1: 32}.get(in_isz, 8)

    # Clamp tiles to the (padded) problem; lane dims stay multiples of 128.
    tm = _round_up(min(tm, _round_up(M, sub)), sub)
    tn = min(tn, _round_up(n_out, 128))
    tk = min(tk, _round_up(n_in, 128))

    M_pad = _round_up(M, tm)
    N_pad = _round_up(n_out, tn)
    K_pad = _round_up(n_in, tk)

    # Megacore guard (v7x has 2 TensorCores): don't let large tiles collapse
    # both 'parallel' grid axes to a single block when there is work to split.
    if M_pad // tm == 1 and N_pad // tn == 1:
        if tm >= 512:
            tm = _round_up((tm + 1) // 2, sub)
        elif tn >= 512:
            tn = _round_up((tn + 1) // 2, 128)
        M_pad = _round_up(M, tm)
        N_pad = _round_up(n_out, tn)

    # Cast like torch's weight.type_as(x) (optionally to bf16 for the MXU);
    # bias stays in f32 and is added to the f32 accumulator.
    # TODO(synk): pre-cast / pre-pad the weight once at model init so the full
    # K*N weight isn't re-materialized in HBM on every call.
    x2 = x2.astype(mxu_dtype) if x2.dtype != mxu_dtype else x2
    w = weight.astype(mxu_dtype) if weight.dtype != mxu_dtype else weight
    b = jnp.zeros((n_out,), jnp.float32) if bias is None else bias.astype(jnp.float32)

    # Zero-pad to tile multiples only when needed (zero K rows/cols add 0).
    if M_pad != M or K_pad != n_in:
        x2 = jnp.pad(x2, ((0, M_pad - M), (0, K_pad - n_in)))
    if K_pad != n_in or N_pad != n_out:
        w = jnp.pad(w, ((0, K_pad - n_in), (0, N_pad - n_out)))
    if N_pad != n_out:
        b = jnp.pad(b, (0, N_pad - n_out))
    b2 = b.reshape(1, N_pad)

    grid = (M_pad // tm, N_pad // tn, K_pad // tk)

    accumulate_in_out = out_dtype == jnp.float32
    if accumulate_in_out:
        kernel = _conv1d_kernel_f32_out
        scratch_shapes = []
        acc_bytes = 0
    else:
        kernel = _conv1d_kernel_acc
        scratch_shapes = [pltpu.VMEM((tm, tn), jnp.float32)]
        acc_bytes = tm * tn * 4

    # Double-buffered x/w/bias/out tiles (+ f32 accumulator when used), with a
    # generation-aware cap: physical VMEM minus 16 MiB headroom (matters on
    # v7x's 64 MiB/TC).
    needed = (
        2 * (tm * tk + tk * tn) * in_isz
        + 2 * tn * 4
        + 2 * tm * tn * out_isz
        + acc_bytes
    )
    vmem_limit = max(32 << 20, 2 * needed)
    vmem_limit = min(vmem_limit, vmem_cap - (16 << 20))
    vmem_limit = max(vmem_limit, needed + (4 << 20))

    flops = 2 * M_pad * K_pad * N_pad
    # x is re-read once per N tile, weight once per M tile.
    bytes_accessed = (
        in_isz * (grid[1] * M_pad * K_pad + grid[0] * K_pad * N_pad)
        + 4 * N_pad
        + out_isz * M_pad * N_pad
    )

    out2 = pl.pallas_call(
        kernel,
        out_shape=jax.ShapeDtypeStruct((M_pad, N_pad), out_dtype),
        grid_spec=pltpu.PrefetchScalarGridSpec(
            num_scalar_prefetch=0,
            grid=grid,
            in_specs=[
                pl.BlockSpec((tm, tk), lambda i, j, k: (i, k)),  # x tile
                pl.BlockSpec((tk, tn), lambda i, j, k: (k, j)),  # weight tile
                pl.BlockSpec((1, tn), lambda i, j, k: (0, j)),   # bias row (f32)
            ],
            out_specs=pl.BlockSpec((tm, tn), lambda i, j, k: (i, j)),
            scratch_shapes=scratch_shapes,
        ),
        compiler_params=pltpu.CompilerParams(
            dimension_semantics=("parallel", "parallel", "arbitrary"),
            vmem_limit_bytes=int(vmem_limit),
        ),
        cost_estimate=pl.CostEstimate(
            flops=int(flops), transcendentals=0, bytes_accessed=int(bytes_accessed)
        ),
    )(x2, w, b2)

    out = out2[:M, :n_out]
    return out.reshape(*orig_shape[:-1], n_out)


if __name__ == "__main__":
    key = jax.random.PRNGKey(0)
    k_w, k_x, k_w2, k_x2, k_w3, k_x3 = jax.random.split(key, 6)

    # --- Check 1: module-sized shapes, exact f32 path (matches torch addmm) ---
    n_in, n_out = 32, 64
    batch, seq = 2, 8
    init_scale = 1.0
    weight = (0.02 * init_scale) * jax.random.normal(k_w, (n_in, n_out), jnp.float32)
    bias = jnp.zeros((n_out,), jnp.float32)
    x = jax.random.normal(k_x, (batch, seq, n_in), jnp.float32)

    y = jax.block_until_ready(conv1d(x, weight, bias, cast_to_bf16=False))
    y_ref = (x.reshape(-1, n_in) @ weight + bias).reshape(batch, seq, n_out)
    assert y.shape == (batch, seq, n_out), y.shape
    assert jnp.allclose(y, y_ref, atol=1e-5, rtol=1e-5), "mismatch (small f32)"

    # --- Check 2: padding + (3,3,3) grid incl. K accumulation, f32 path ---
    n_in2, n_out2 = 640, 320
    batch2, seq2 = 4, 96
    weight2 = 0.02 * jax.random.normal(k_w2, (n_in2, n_out2), jnp.float32)
    bias2 = 0.01 * jnp.ones((n_out2,), jnp.float32)
    x2 = jax.random.normal(k_x2, (batch2, seq2, n_in2), jnp.float32)
    y2_ref = (x2.reshape(-1, n_in2) @ weight2 + bias2).reshape(batch2, seq2, n_out2)

    y2 = jax.block_until_ready(
        conv1d(x2, weight2, bias2, tm=128, tn=128, tk=256, cast_to_bf16=False)
    )
    assert y2.shape == (batch2, seq2, n_out2), y2.shape
    assert jnp.allclose(y2, y2_ref, atol=1e-4, rtol=1e-4), "mismatch (tiled f32)"

    # --- Check 3: same shapes, default bf16-MXU fast path (f32 accumulation) ---
    y2b = jax.block_until_ready(conv1d(x2, weight2, bias2, tm=128, tn=128, tk=256))
    assert jnp.allclose(y2b, y2_ref, atol=2e-2, rtol=2e-2), "mismatch (bf16 MXU)"

    # --- Check 4: bf16 activations (scratch-accumulator kernel, bf16 output) ---
    n_in3, n_out3 = 256, 384
    x3 = jax.random.normal(k_x3, (2, 64, n_in3), jnp.float32).astype(jnp.bfloat16)
    weight3 = 0.02 * jax.random.normal(k_w3, (n_in3, n_out3), jnp.float32)
    bias3 = 0.01 * jnp.ones((n_out3,), jnp.float32)
    y3 = jax.block_until_ready(conv1d(x3, weight3, bias3, tk=128))
    assert y3.dtype == jnp.bfloat16, y3.dtype
    y3_ref = (
        x3.astype(jnp.float32).reshape(-1, n_in3)
        @ weight3.astype(jnp.bfloat16).astype(jnp.float32)
        + bias3
    ).reshape(2, 64, n_out3)
    assert jnp.allclose(y3.astype(jnp.float32), y3_ref, atol=2e-2, rtol=5e-2), \
        "mismatch (bf16 activations)"

    print("KERNEL_OK")
</pallas_src>

<mosaic_0001>
module attributes {stable_mosaic.version = 11 : i64} {
  func.func @_conv1d_kernel_f32_out(%arg0: i32, %arg1: i32, %arg2: i32, %arg3: memref<16x128xf32, #tpu.memory_space<vmem>>, %arg4: memref<128x128xf32, #tpu.memory_space<vmem>>, %arg5: memref<1x128xf32, #tpu.memory_space<vmem>>, %arg6: memref<16x128xf32, #tpu.memory_space<vmem>>) attributes {dimension_semantics = [#tpu.dimension_semantics<parallel>, #tpu.dimension_semantics<parallel>, #tpu.dimension_semantics<arbitrary>], iteration_bounds = array<i64: 1, 1, 1>, scalar_prefetch = 0 : i64, scratch_operands = 0 : i64, tpu.core_type = #tpu.core_type<tc>, window_params = [{transform_indices = @transform_0, window_bounds = array<i64: 16, 128>}, {transform_indices = @transform_1, window_bounds = array<i64: 128, 128>}, {transform_indices = @transform_2, window_bounds = array<i64: 1, 128>}, {transform_indices = @transform_3, window_bounds = array<i64: 16, 128>}]} {
    %c0_i32 = arith.constant 0 : i32
    %0 = arith.cmpi eq, %arg2, %c0_i32 : i32
    %1 = arith.extui %0 : i1 to i32
    %c0_i32_0 = arith.constant 0 : i32
    %2 = arith.cmpi ne, %1, %c0_i32_0 : i32
    scf.if %2 {
      %cst_10 = arith.constant 0.000000e+00 : f32
      %12 = vector.broadcast %cst_10 : f32 to vector<16x128xf32>
      %c0_11 = arith.constant 0 : index
      %c0_12 = arith.constant 0 : index
      %13 = vector.load %arg6[%c0_11, %c0_12] : memref<16x128xf32, #tpu.memory_space<vmem>>, vector<16x128xf32>
      tpu.vector_store %arg6[%c0_11, %c0_12], %12 {strides = array<i32>} : memref<16x128xf32, #tpu.memory_space<vmem>>, vector<16x128xf32>,
    } else {
    }
    %c0 = arith.constant 0 : index
    %c0_1 = arith.constant 0 : index
    %3 = vector.load %arg6[%c0, %c0_1] : memref<16x128xf32, #tpu.memory_space<vmem>>, vector<16x128xf32>
    %c0_2 = arith.constant 0 : index
    %c0_3 = arith.constant 0 : index
    %4 = vector.load %arg3[%c0_2, %c0_3] : memref<16x128xf32, #tpu.memory_space<vmem>>, vector<16x128xf32>
    %c0_4 = arith.constant 0 : index
    %c0_5 = arith.constant 0 : index
    %5 = vector.load %arg4[%c0_4, %c0_5] : memref<128x128xf32, #tpu.memory_space<vmem>>, vector<128x128xf32>
    %cst = arith.constant dense<0.000000e+00> : vector<16x128xf32>
    %6 = tpu.matmul %4, %5, %cst {dimension_numbers = #tpu.dot_dimension_numbers<[1], [0], [0], [1], [0, 0, 1, 1], [], []>} : vector<16x128xf32>, vector<128x128xf32>, vector<16x128xf32> -> vector<16x128xf32>
    %7 = arith.addf %3, %6 : vector<16x128xf32>
    %c0_6 = arith.constant 0 : index
    %c0_7 = arith.constant 0 : index
    %8 = vector.load %arg6[%c0_6, %c0_7] : memref<16x128xf32, #tpu.memory_space<vmem>>, vector<16x128xf32>
    tpu.vector_store %arg6[%c0_6, %c0_7], %7 {strides = array<i32>} : memref<16x128xf32, #tpu.memory_space<vmem>>, vector<16x128xf32>,
    %c0_i32_8 = arith.constant 0 : i32
    %9 = arith.cmpi eq, %arg2, %c0_i32_8 : i32
    %10 = arith.extui %9 : i1 to i32
    %c0_i32_9 = arith.constant 0 : i32
    %11 = arith.cmpi ne, %10, %c0_i32_9 : i32
    scf.if %11 {
      %c0_10 = arith.constant 0 : index
      %c0_11 = arith.constant 0 : index
      %12 = vector.load %arg6[%c0_10, %c0_11] : memref<16x128xf32, #tpu.memory_space<vmem>>, vector<16x128xf32>
      %c0_12 = arith.constant 0 : index
      %c0_13 = arith.constant 0 : index
      %13 = vector.load %arg5[%c0_12, %c0_13] : memref<1x128xf32, #tpu.memory_space<vmem>>, vector<1x128xf32>
      %14 = vector.broadcast %13 : vector<1x128xf32> to vector<16x128xf32>
      %15 = arith.addf %12, %14 : vector<16x128xf32>
      %c0_14 = arith.constant 0 : index
      %c0_15 = arith.constant 0 : index
      %16 = vector.load %arg6[%c0_14, %c0_15] : memref<16x128xf32, #tpu.memory_space<vmem>>, vector<16x128xf32>
      tpu.vector_store %arg6[%c0_14, %c0_15], %15 {strides = array<i32>} : memref<16x128xf32, #tpu.memory_space<vmem>>, vector<16x128xf32>,
    } else {
    }
    return
  }
  func.func @transform_0(%arg0: i32, %arg1: i32, %arg2: i32) -> (i32, i32) {
    %c0_i32 = arith.constant 0 : i32
    return %arg0, %arg2 : i32, i32
  }
  func.func @transform_1(%arg0: i32, %arg1: i32, %arg2: i32) -> (i32, i32) {
    %c0_i32 = arith.constant 0 : i32
    return %arg2, %arg1 : i32, i32
  }
  func.func @transform_2(%arg0: i32, %arg1: i32, %arg2: i32) -> (i32, i32) {
    %c0_i32 = arith.constant 0 : i32
    %c0_i32_0 = arith.constant 0 : i32
    return %c0_i32, %arg1 : i32, i32
  }
  func.func @transform_3(%arg0: i32, %arg1: i32, %arg2: i32) -> (i32, i32) {
    %c0_i32 = arith.constant 0 : i32
    return %arg0, %arg1 : i32, i32
  }
}

</mosaic_0001>

<llo_original>
// kernel: tpu_custom_call.1
$region0: #{tpu_custom_call.1}
  #allocation0 [shape = 'u32[]', space=smem, size = 0x4, offset = 0x4, fixed_abs, tag = 'smem constant byte address 0x4 - core index']
  #allocation1 [shape = 'u32[144,128]{1,0:T(1,128)}', space=vmem, size = 0x12000, scoped, tag = 'internal scratch']
  %s0 = inlined_call_operand.hbm [shape: f32[16,128], index: 0, kind: input, shape index: {}]
  %s1 = inlined_call_operand.hbm [shape: f32[128,128], index: 1, kind: input, shape index: {}]
  %s2 = inlined_call_operand.vmem [shape: f32[1,128], index: 2, kind: input, shape index: {}]
  %s3 = inlined_call_operand.hbm [shape: f32[16,128], index: 3, kind: output, shape index: {}]
  %s4 = sld [smem:[#allocation0]]
  $region38: #{tpu_custom_call.1} parent=0
    _
  %s6 = ssub.s32 1, %s4
  %s7 = scalar_select 0, %s6, %s4
  $region1: #{tpu_custom_call.1} parent=0
    #allocation2 [shape = 'u8[8192]{0}', space=vmem, size = 0x2000, scoped, tag = 'input window, operand 0, single buffered']
    #allocation3 [shape = 's32[1]{0}', space=sflag, size = 0x4, scoped, tag = 'scoped memory for tpu_custom_call.1']
    #allocation4 [shape = 's32[1]{0}', space=sflag, size = 0x4, scoped, tag = 'scoped memory for tpu_custom_call.1']
    #allocation5 [shape = 'u8[65536]{0}', space=vmem, size = 0x10000, scoped, tag = 'input window, operand 1, single buffered']
    #allocation6 [shape = 's32[1]{0}', space=sflag, size = 0x4, scoped, tag = 'scoped memory for tpu_custom_call.1']
    #allocation7 [shape = 'u8[8192]{0}', space=vmem, size = 0x2000, scoped, tag = 'output window, operand 0, single buffered']
    %8 = vsyncpa [#allocation3], 0
    %9 = vsyncpa [#allocation6], 0
    %10 = vsyncpa [#allocation4], 0
    // Predicated region
    $region2: #{tpu_custom_call.1} parent=1 // pred_check
      _
    $region3: #{tpu_custom_call.1} parent=1 // pred_check_branch
      %12 = sbr.rel (0) target = $region5
    $region4: #{tpu_custom_call.1} parent=1 // pred_region
      %s14 = ssub.s32 256, 256
      %15 = vsyncadd [#allocation3], %s14
      %s16 = sshll.u32 [#allocation2], 4
      %s17 = int_to_ptr.vmem [resolvable:$true] %s16
      %22 = dma.hbm_to_vmem [thread:$0]  %s0, 256, %s17, [#allocation3], 128, 128, 8
    $region5: #{tpu_custom_call.1} parent=1 // pred_fallthru
      _
    // Predicated region
    $region6: #{tpu_custom_call.1} parent=1 // pred_check
      _
    $region7: #{tpu_custom_call.1} parent=1 // pred_check_branch
      %24 = sbr.rel (0) target = $region9
    $region8: #{tpu_custom_call.1} parent=1 // pred_region
      %s26 = ssub.s32 2048, 2048
      %27 = vsyncadd [#allocation6], %s26
      %s28 = sshll.u32 [#allocation5], 4
      %s29 = int_to_ptr.vmem [resolvable:$true] %s28
      %34 = dma.hbm_to_vmem [thread:$0]  %s1, 2048, %s29, [#allocation6], 128, 128, 8
    $region9: #{tpu_custom_call.1} parent=1 // pred_fallthru
      _
    // Predicated region
    $region10: #{tpu_custom_call.1} parent=1 // pred_check
      _
    $region11: #{tpu_custom_call.1} parent=1 // pred_check_branch
      %36 = sbr.rel (0) target = $region13
    $region12: #{tpu_custom_call.1} parent=1 // pred_region
      _
    $region13: #{tpu_custom_call.1} parent=1 // pred_fallthru
      _
    // Predicated region
    $region14: #{tpu_custom_call.1} parent=1 // pred_check
      _
    $region15: #{tpu_custom_call.1} parent=1 // pred_check_branch
      %38 = sbr.rel (0) target = $region17
    $region16: #{tpu_custom_call.1} parent=1 // pred_region
      %39 = dma.done [#allocation3], 256
    $region17: #{tpu_custom_call.1} parent=1 // pred_fallthru
      _
    // Predicated region
    $region18: #{tpu_custom_call.1} parent=1 // pred_check
      _
    $region19: #{tpu_custom_call.1} parent=1 // pred_check_branch
      %41 = sbr.rel (0) target = $region21
    $region20: #{tpu_custom_call.1} parent=1 // pred_region
      %42 = dma.done [#allocation6], 2048
    $region21: #{tpu_custom_call.1} parent=1 // pred_fallthru
      _
    %p43 = scmp.eq.s32.totalorder 0, 0
    // Predicated region
    $region22: #{tpu_custom_call.1} parent=1 // pred_check
      %p44 = pneg %p43
    $region23: #{tpu_custom_call.1} parent=1 // pred_check_branch
      %46 = sbr.rel (%p44) target = $region25
    $region24: #{tpu_custom_call.1} parent=1 // pred_region
      %47 = vst [vmem:[#allocation7] sm:$0xff] 0.0
      %48 = vst [vmem:[#allocation7 + $0x8] sm:$0xff] 0.0
    $region25: #{tpu_custom_call.1} parent=1 // pred_fallthru
      _
    %v49 = vld [vmem:[#allocation7] sm:$0xff]
    %v50 = vld [vmem:[#allocation7 + $0x8] sm:$0xff]
    %v51 = vld [vmem:[#allocation2] sm:$0xff]
    %v52 = vld [vmem:[#allocation2 + $0x8] sm:$0xff]
    %v53 = vld [vmem:[#allocation5] sm:$0xff]
    %v54 = vld [vmem:[#allocation5 + $0x8] sm:$0xff]
    %v55 = vld [vmem:[#allocation5 + $0x10] sm:$0xff]
    %v56 = vld [vmem:[#allocation5 + $0x18] sm:$0xff]
    %v57 = vld [vmem:[#allocation5 + $0x20] sm:$0xff]
    %v58 = vld [vmem:[#allocation5 + $0x28] sm:$0xff]
    %v59 = vld [vmem:[#allocation5 + $0x30] sm:$0xff]
    %v60 = vld [vmem:[#allocation5 + $0x38] sm:$0xff]
    %v61 = vld [vmem:[#allocation5 + $0x40] sm:$0xff]
    %v62 = vld [vmem:[#allocation5 + $0x48] sm:$0xff]
    %v63 = vld [vmem:[#allocation5 + $0x50] sm:$0xff]
    %v64 = vld [vmem:[#allocation5 + $0x58] sm:$0xff]
    %v65 = vld [vmem:[#allocation5 + $0x60] sm:$0xff]
    %v66 = vld [vmem:[#allocation5 + $0x68] sm:$0xff]
    %v67 = vld [vmem:[#allocation5 + $0x70] sm:$0xff]
    %v68 = vld [vmem:[#allocation5 + $0x78] sm:$0xff]
    %69 = vmatprep.subr.mxu0 0.0
    %70 = vmatpush1.msra.mxu0 %v53
    %71 = vmatprep.subr.mxu0 0.0
    %72 = vmatpush1.msra.mxu0 %v54
    %73 = vmatprep.subr.mxu0 0.0
    %74 = vmatpush1.msra.mxu0 %v55
    %75 = vmatprep.subr.mxu0 0.0
    %76 = vmatpush1.msra.mxu0 %v56
    %77 = vmatprep.subr.mxu0 0.0
    %78 = vmatpush1.msra.mxu0 %v57
    %79 = vmatprep.subr.mxu0 0.0
    %80 = vmatpush1.msra.mxu0 %v58
    %81 = vmatprep.subr.mxu0 0.0
    %82 = vmatpush1.msra.mxu0 %v59
    %83 = vmatprep.subr.mxu0 0.0
    %84 = vmatpush1.msra.mxu0 %v60
    %85 = vmatprep.subr.mxu0 0.0
    %86 = vmatpush1.msra.mxu0 %v61
    %87 = vmatprep.subr.mxu0 0.0
    %88 = vmatpush1.msra.mxu0 %v62
    %89 = vmatprep.subr.mxu0 0.0
    %90 = vmatpush1.msra.mxu0 %v63
    %91 = vmatprep.subr.mxu0 0.0
    %92 = vmatpush1.msra.mxu0 %v64
    %93 = vmatprep.subr.mxu0 0.0
    %94 = vmatpush1.msra.mxu0 %v65
    %95 = vmatprep.subr.mxu0 0.0
    %96 = vmatpush1.msra.mxu0 %v66
    %97 = vmatprep.subr.mxu0 0.0
    %98 = vmatpush1.msra.mxu0 %v67
    %99 = vmatprep.subr.mxu0 0.0
    %100 = vmatpush1.msra.mxu0 %v68
    %101 = vmatprep.subr.mxu0 0.0
    %102 = vmatpush1.msra.mxu0 0.0
    %103 = vmatprep.subr.mxu0 0.0
    %104 = vmatpush1.msra.mxu0 0.0
    %105 = vmatprep.subr.mxu0 0.0
    %106 = vmatpush1.msra.mxu0 0.0
    %107 = vmatprep.subr.mxu0 0.0
    %108 = vmatpush1.msra.mxu0 0.0
    %109 = vmatprep.subr.mxu0 0.0
    %110 = vmatpush1.msra.mxu0 0.0
    %111 = vmatprep.subr.mxu0 0.0
    %112 = vmatpush1.msra.mxu0 0.0
    %113 = vmatprep.subr.mxu0 0.0
    %114 = vmatpush1.msra.mxu0 0.0
    %115 = vmatprep.subr.mxu0 0.0
    %116 = vmatpush1.msra.mxu0 0.0
    %117 = vmatprep.subr.mxu0 0.0
    %118 = vmatpush1.msra.mxu0 0.0
    %119 = vmatprep.subr.mxu0 0.0
    %120 = vmatpush1.msra.mxu0 0.0
    %121 = vmatprep.subr.mxu0 0.0
    %122 = vmatpush1.msra.mxu0 0.0
    %123 = vmatprep.subr.mxu0 0.0
    %124 = vmatpush1.msra.mxu0 0.0
    %125 = vmatprep.subr.mxu0 0.0
    %126 = vmatpush1.msra.mxu0 0.0
    %127 = vmatprep.subr.mxu0 0.0
    %128 = vmatpush1.msra.mxu0 0.0
    %129 = vmatprep.subr.mxu0 0.0
    %130 = vmatpush1.msra.mxu0 0.0
    %131 = vmatprep.subr.mxu0 0.0
    %132 = vmatpush1.msra.mxu0 0.0
    %133 = vmatprep.mubr.f32.mxu0 0.0
    %134 = vmatmul.mubr.f32.gmra.mrb[0].mxu0 %v51
    %v135 = vpop.f32.mrb[0].mxu0
    %v136 = vadd.f32 0.0, %v135
    %v137 = vpop.f32.mrb[0].mxu0
    %138 = vmatprep.mubr.f32.mxu0 0.0
    %139 = vmatmul.mubr.f32.gmra.mrb[0].mxu0 %v52
    %v140 = vpop.f32.mrb[0].mxu0
    %v141 = vadd.f32 0.0, %v140
    %v142 = vpop.f32.mrb[0].mxu0
    %143 = vdwg.mxu0
    %v144 = vadd.f32 %v49, %v136
    %v145 = vadd.f32 %v50, %v141
    %146 = vst [vmem:[#allocation7] sm:$0xff] %v144
    %147 = vst [vmem:[#allocation7 + $0x8] sm:$0xff] %v145
    // Predicated region
    $region26: #{tpu_custom_call.1} parent=1 // pred_check
      %p148 = pneg %p43
    $region27: #{tpu_custom_call.1} parent=1 // pred_check_branch
      %150 = sbr.rel (%p148) target = $region29
    $region28: #{tpu_custom_call.1} parent=1 // pred_region
      %v151 = vld [vmem:[#allocation7] sm:$0xff]
      %v152 = vld [vmem:[#allocation7 + $0x8] sm:$0xff]
      %v153 = vld [vmem:[%s2] sm:$0x1]
      %v155 = vlaneseq
      %v156 = vshrl.u32 %v155, 7
      %v157 = vsub.s32 0, %v156
      %v158 = vrot.slane %v153, %v157
      %v160 = vadd.f32 %v151, %v158
      %v161 = vadd.f32 %v152, %v158
      %162 = vst [vmem:[#allocation7] sm:$0xff] %v160
      %163 = vst [vmem:[#allocation7 + $0x8] sm:$0xff] %v161
    $region29: #{tpu_custom_call.1} parent=1 // pred_fallthru
      _
    // Predicated region
    $region30: #{tpu_custom_call.1} parent=1 // pred_check
      _
    $region31: #{tpu_custom_call.1} parent=1 // pred_check_branch
      %165 = sbr.rel (0) target = $region33
    $region32: #{tpu_custom_call.1} parent=1 // pred_region
      %s167 = ssub.s32 256, 256
      %168 = vsyncadd [#allocation4], %s167
      %s169 = sshll.u32 [#allocation7], 4
      %s170 = int_to_ptr.vmem [resolvable:$true] %s169
      %175 = dma.vmem_to_hbm [thread:$0]  %s170, 256, %s3, [#allocation4], 128, 128, 8
    $region33: #{tpu_custom_call.1} parent=1 // pred_fallthru
      _
    // Predicated region
    $region34: #{tpu_custom_call.1} parent=1 // pred_check
      _
    $region35: #{tpu_custom_call.1} parent=1 // pred_check_branch
      %177 = sbr.rel (0) target = $region37
    $region36: #{tpu_custom_call.1} parent=1 // pred_region
      %178 = dma.done [#allocation4], 256
    $region37: #{tpu_custom_call.1} parent=1 // pred_fallthru
      _
    %179 = vsyncpa [#allocation3], 1
    %180 = vsyncpa [#allocation6], 1
    %181 = vsyncpa [#allocation4], 1

</llo_original>
